<compile_context>
chip_gen: v7x
topology: tpu7x:2x2x1
jax: 0.10.0
libtpu: 0.0.40
codegen_flags: <defaults>
</compile_context>

<pallas_src>
import functools

import jax
import jax.numpy as jnp
from jax.experimental import pallas as pl
from jax.experimental.pallas import tpu as pltpu


def mlp_kernel(x_ref, w1_ref, w2_ref, w3_ref, w4_ref, b_ref, o_ref, *, l1, l2, l3):
    # x_ref: (in_dim, tile_b)  -- batch on lanes
    # w*_ref: (out_i, in_i)    -- PyTorch nn.Linear weight layout
    # b_ref: (l1+l2+l3+1, 1)   -- all biases concatenated along sublanes
    # o_ref: (1, tile_b)       -- lane-dense output slab
    xt = x_ref[...]

    b1 = b_ref[0:l1, :]
    b2 = b_ref[l1:l1 + l2, :]
    b3 = b_ref[l1 + l2:l1 + l2 + l3, :]
    b4 = b_ref[l1 + l2 + l3:l1 + l2 + l3 + 1, :]

    # layer 1 + ReLU : (l1, tile_b)
    h = jnp.dot(w1_ref[...], xt, preferred_element_type=jnp.float32)
    h = jnp.maximum(h + b1, 0.0)
    # layer 2 + ReLU : (l2, tile_b)
    h = jnp.dot(w2_ref[...], h, preferred_element_type=jnp.float32)
    h = jnp.maximum(h + b2, 0.0)
    # layer 3 + ReLU : (l3, tile_b)
    h = jnp.dot(w3_ref[...], h, preferred_element_type=jnp.float32)
    h = jnp.maximum(h + b3, 0.0)
    # layer 4 + Sigmoid : (1, tile_b), lane-dense store
    z = jnp.dot(w4_ref[...], h, preferred_element_type=jnp.float32)
    o_ref[...] = jax.nn.sigmoid(z + b4)


def _choose_tile_b(B):
    # Prefer big lane-aligned tiles (85%+ of roofline at >=512 wide); if B is
    # small / not lane-aligned, just run one whole-array invocation (no grid
    # prologue/epilogue overhead).
    for t in (512, 256, 128):
        if B % t == 0:
            return t
    return B


def ann_forward(x, params, *, tile_b=None):
    """Fused 4-layer MLP forward pass in one Pallas kernel.

    x:      (B, in_dim) float32
    params: ((w1, b1), ..., (w4, b4)) with w_i of shape (out_i, in_i) and
            b_i of shape (out_i,)  (PyTorch nn.Linear convention).
    returns (B, 1) float32
    """
    (w1, b1), (w2, b2), (w3, b3), (w4, b4) = params
    B, in_dim = x.shape
    l1, l2, l3 = w1.shape[0], w2.shape[0], w3.shape[0]
    n_bias = l1 + l2 + l3 + 1

    if tile_b is None:
        tile_b = _choose_tile_b(B)
    assert B % tile_b == 0, "batch must be divisible by tile_b"
    grid = (pl.cdiv(B, tile_b),)

    # Layout plumbing in the wrapper: batch onto the lane axis, biases fused.
    x_t = x.T  # (in_dim, B)
    b_all = jnp.concatenate(
        [b1.reshape(-1, 1), b2.reshape(-1, 1), b3.reshape(-1, 1), b4.reshape(-1, 1)],
        axis=0,
    )  # (n_bias, 1)

    def full(arr):
        # whole-array block, constant index map (resident across the batch grid)
        return pl.BlockSpec(arr.shape, lambda i: (0,) * arr.ndim)

    kernel = functools.partial(mlp_kernel, l1=l1, l2=l2, l3=l3)

    out_t = pl.pallas_call(
        kernel,
        out_shape=jax.ShapeDtypeStruct((1, B), jnp.float32),
        grid_spec=pltpu.PrefetchScalarGridSpec(
            num_scalar_prefetch=0,
            grid=grid,
            in_specs=[
                pl.BlockSpec((in_dim, tile_b), lambda i: (0, i)),  # x^T tile
                full(w1), full(w2), full(w3), full(w4),
                full(b_all),
            ],
            out_specs=pl.BlockSpec((1, tile_b), lambda i: (0, i)),  # lane-dense
        ),
        compiler_params=pltpu.CompilerParams(
            dimension_semantics=("parallel",)),
    )(x_t, w1, w2, w3, w4, b_all)

    return out_t.T  # (B, 1)


def init_params(key, input_size, l1, l2, l3):
    """Deterministic init. Weights (out, in); biases (out,) — PyTorch convention."""
    sizes = [(input_size, l1), (l1, l2), (l2, l3), (l3, 1)]
    params = []
    for idx, (fan_in, fan_out) in enumerate(sizes):
        kw, kb, key = jax.random.split(jax.random.fold_in(key, idx), 3)
        bound = 1.0 / jnp.sqrt(fan_in)
        w = jax.random.uniform(kw, (fan_out, fan_in), jnp.float32, -bound, bound)
        b = jax.random.uniform(kb, (fan_out,), jnp.float32, -bound, bound)
        params.append((w, b))
    return params


def ann_reference(x, params):
    (w1, b1), (w2, b2), (w3, b3), (w4, b4) = params
    h = jnp.maximum(x @ w1.T + b1, 0.0)
    h = jnp.maximum(h @ w2.T + b2, 0.0)
    h = jnp.maximum(h @ w3.T + b3, 0.0)
    return jax.nn.sigmoid(h @ w4.T + b4)


if __name__ == "__main__":
    key = jax.random.PRNGKey(0)

    # small shapes consistent with the module's forward
    batch = 16
    input_size, layer1_size, layer2_size, layer3_size = 32, 64, 32, 16

    kx, kp = jax.random.split(key)
    x = jax.random.normal(kx, (batch, input_size), jnp.float32)
    params = init_params(kp, input_size, layer1_size, layer2_size, layer3_size)

    out = ann_forward(x, params)
    out = jax.block_until_ready(out)

    ref = ann_reference(x, params)
    assert out.shape == (batch, 1)
    assert jnp.allclose(out, ref, atol=1e-5, rtol=1e-5), "mismatch vs reference"

    print("KERNEL_OK")
</pallas_src>

<mosaic_0001>
module attributes {stable_mosaic.version = 11 : i64} {
  func.func @mlp_kernel(%arg0: i32, %arg1: memref<32x16xf32, #tpu.memory_space<vmem>>, %arg2: memref<64x32xf32, #tpu.memory_space<vmem>>, %arg3: memref<32x64xf32, #tpu.memory_space<vmem>>, %arg4: memref<16x32xf32, #tpu.memory_space<vmem>>, %arg5: memref<1x16xf32, #tpu.memory_space<vmem>>, %arg6: memref<113x1xf32, #tpu.memory_space<vmem>>, %arg7: memref<1x16xf32, #tpu.memory_space<vmem>>) attributes {dimension_semantics = [#tpu.dimension_semantics<parallel>], iteration_bounds = array<i64: 1>, scalar_prefetch = 0 : i64, scratch_operands = 0 : i64, tpu.core_type = #tpu.core_type<tc>, window_params = [{transform_indices = @transform_0, window_bounds = array<i64: 32, 16>}, {pipeline_mode = #tpu.pipeline_mode<synchronous>, transform_indices = @transform_1, window_bounds = array<i64: 64, 32>}, {pipeline_mode = #tpu.pipeline_mode<synchronous>, transform_indices = @transform_2, window_bounds = array<i64: 32, 64>}, {pipeline_mode = #tpu.pipeline_mode<synchronous>, transform_indices = @transform_3, window_bounds = array<i64: 16, 32>}, {pipeline_mode = #tpu.pipeline_mode<synchronous>, transform_indices = @transform_4, window_bounds = array<i64: 1, 16>}, {pipeline_mode = #tpu.pipeline_mode<synchronous>, transform_indices = @transform_5, window_bounds = array<i64: 113, 1>}, {transform_indices = @transform_6, window_bounds = array<i64: 1, 16>}]} {
    %c0 = arith.constant 0 : index
    %c0_0 = arith.constant 0 : index
    %0 = vector.load %arg1[%c0, %c0_0] : memref<32x16xf32, #tpu.memory_space<vmem>>, vector<32x16xf32>
    %c0_1 = arith.constant 0 : index
    %c0_2 = arith.constant 0 : index
    %1 = vector.load %arg6[%c0_1, %c0_2] : memref<113x1xf32, #tpu.memory_space<vmem>>, vector<64x1xf32>
    %c64 = arith.constant 64 : index
    %c0_3 = arith.constant 0 : index
    %2 = vector.load %arg6[%c64, %c0_3] : memref<113x1xf32, #tpu.memory_space<vmem>>, vector<32x1xf32>
    %c96 = arith.constant 96 : index
    %c0_4 = arith.constant 0 : index
    %3 = vector.load %arg6[%c96, %c0_4] : memref<113x1xf32, #tpu.memory_space<vmem>>, vector<16x1xf32>
    %c112 = arith.constant 112 : index
    %c0_5 = arith.constant 0 : index
    %4 = vector.load %arg6[%c112, %c0_5] : memref<113x1xf32, #tpu.memory_space<vmem>>, vector<1x1xf32>
    %c0_6 = arith.constant 0 : index
    %c0_7 = arith.constant 0 : index
    %5 = vector.load %arg2[%c0_6, %c0_7] : memref<64x32xf32, #tpu.memory_space<vmem>>, vector<64x32xf32>
    %cst = arith.constant dense<0.000000e+00> : vector<64x16xf32>
    %6 = tpu.matmul %5, %0, %cst {dimension_numbers = #tpu.dot_dimension_numbers<[1], [0], [0], [1], [0, 0, 1, 1], [], []>} : vector<64x32xf32>, vector<32x16xf32>, vector<64x16xf32> -> vector<64x16xf32>
    %7 = vector.broadcast %1 : vector<64x1xf32> to vector<64x16xf32>
    %8 = arith.addf %6, %7 : vector<64x16xf32>
    %cst_8 = arith.constant 0.000000e+00 : f32
    %9 = vector.broadcast %cst_8 : f32 to vector<64x16xf32>
    %10 = arith.maximumf %8, %9 : vector<64x16xf32>
    %c0_9 = arith.constant 0 : index
    %c0_10 = arith.constant 0 : index
    %11 = vector.load %arg3[%c0_9, %c0_10] : memref<32x64xf32, #tpu.memory_space<vmem>>, vector<32x64xf32>
    %cst_11 = arith.constant dense<0.000000e+00> : vector<32x16xf32>
    %12 = tpu.matmul %11, %10, %cst_11 {dimension_numbers = #tpu.dot_dimension_numbers<[1], [0], [0], [1], [0, 0, 1, 1], [], []>} : vector<32x64xf32>, vector<64x16xf32>, vector<32x16xf32> -> vector<32x16xf32>
    %13 = vector.broadcast %2 : vector<32x1xf32> to vector<32x16xf32>
    %14 = arith.addf %12, %13 : vector<32x16xf32>
    %cst_12 = arith.constant 0.000000e+00 : f32
    %15 = vector.broadcast %cst_12 : f32 to vector<32x16xf32>
    %16 = arith.maximumf %14, %15 : vector<32x16xf32>
    %c0_13 = arith.constant 0 : index
    %c0_14 = arith.constant 0 : index
    %17 = vector.load %arg4[%c0_13, %c0_14] : memref<16x32xf32, #tpu.memory_space<vmem>>, vector<16x32xf32>
    %cst_15 = arith.constant dense<0.000000e+00> : vector<16x16xf32>
    %18 = tpu.matmul %17, %16, %cst_15 {dimension_numbers = #tpu.dot_dimension_numbers<[1], [0], [0], [1], [0, 0, 1, 1], [], []>} : vector<16x32xf32>, vector<32x16xf32>, vector<16x16xf32> -> vector<16x16xf32>
    %19 = vector.broadcast %3 : vector<16x1xf32> to vector<16x16xf32>
    %20 = arith.addf %18, %19 : vector<16x16xf32>
    %cst_16 = arith.constant 0.000000e+00 : f32
    %21 = vector.broadcast %cst_16 : f32 to vector<16x16xf32>
    %22 = arith.maximumf %20, %21 : vector<16x16xf32>
    %c0_17 = arith.constant 0 : index
    %c0_18 = arith.constant 0 : index
    %23 = vector.load %arg5[%c0_17, %c0_18] : memref<1x16xf32, #tpu.memory_space<vmem>>, vector<1x16xf32>
    %cst_19 = arith.constant dense<0.000000e+00> : vector<1x16xf32>
    %24 = tpu.matmul %23, %22, %cst_19 {dimension_numbers = #tpu.dot_dimension_numbers<[1], [0], [0], [1], [0, 0, 1, 1], [], []>} : vector<1x16xf32>, vector<16x16xf32>, vector<1x16xf32> -> vector<1x16xf32>
    %25 = vector.broadcast %4 : vector<1x1xf32> to vector<1x16xf32>
    %26 = arith.addf %24, %25 : vector<1x16xf32>
    %27 = arith.negf %26 : vector<1x16xf32>
    %28 = math.exp %27 : vector<1x16xf32>
    %cst_20 = arith.constant 1.000000e+00 : f32
    %29 = vector.broadcast %cst_20 : f32 to vector<1x16xf32>
    %30 = arith.addf %29, %28 : vector<1x16xf32>
    %31 = arith.divf %29, %30 : vector<1x16xf32>
    %c0_21 = arith.constant 0 : index
    %c0_22 = arith.constant 0 : index
    %32 = vector.load %arg7[%c0_21, %c0_22] : memref<1x16xf32, #tpu.memory_space<vmem>>, vector<1x16xf32>
    tpu.vector_store %arg7[%c0_21, %c0_22], %31 {strides = array<i32>} : memref<1x16xf32, #tpu.memory_space<vmem>>, vector<1x16xf32>,
    return
  }
  func.func @transform_0(%arg0: i32) -> (i32, i32) {
    %c0_i32 = arith.constant 0 : i32
    %c0_i32_0 = arith.constant 0 : i32
    return %c0_i32, %arg0 : i32, i32
  }
  func.func @transform_1(%arg0: i32) -> (i32, i32) {
    %c0_i32 = arith.constant 0 : i32
    %c0_i32_0 = arith.constant 0 : i32
    %c0_i32_1 = arith.constant 0 : i32
    return %c0_i32, %c0_i32_0 : i32, i32
  }
  func.func @transform_2(%arg0: i32) -> (i32, i32) {
    %c0_i32 = arith.constant 0 : i32
    %c0_i32_0 = arith.constant 0 : i32
    %c0_i32_1 = arith.constant 0 : i32
    return %c0_i32, %c0_i32_0 : i32, i32
  }
  func.func @transform_3(%arg0: i32) -> (i32, i32) {
    %c0_i32 = arith.constant 0 : i32
    %c0_i32_0 = arith.constant 0 : i32
    %c0_i32_1 = arith.constant 0 : i32
    return %c0_i32, %c0_i32_0 : i32, i32
  }
  func.func @transform_4(%arg0: i32) -> (i32, i32) {
    %c0_i32 = arith.constant 0 : i32
    %c0_i32_0 = arith.constant 0 : i32
    %c0_i32_1 = arith.constant 0 : i32
    return %c0_i32, %c0_i32_0 : i32, i32
  }
  func.func @transform_5(%arg0: i32) -> (i32, i32) {
    %c0_i32 = arith.constant 0 : i32
    %c0_i32_0 = arith.constant 0 : i32
    %c0_i32_1 = arith.constant 0 : i32
    return %c0_i32, %c0_i32_0 : i32, i32
  }
  func.func @transform_6(%arg0: i32) -> (i32, i32) {
    %c0_i32 = arith.constant 0 : i32
    %c0_i32_0 = arith.constant 0 : i32
    return %c0_i32, %arg0 : i32, i32
  }
}

</mosaic_0001>

<llo_original>
// kernel: tpu_custom_call.1
$region0: #{tpu_custom_call.1}
  #allocation0 [shape = 'u32[]', space=smem, size = 0x4, offset = 0x4, fixed_abs, tag = 'smem constant byte address 0x4 - core index']
  #allocation1 [shape = 'u32[144,128]{1,0:T(1,128)}', space=vmem, size = 0x12000, scoped, tag = 'internal scratch']
  %s0 = inlined_call_operand.vmem [shape: f32[32,16], index: 0, kind: input, shape index: {}]
  %s1 = inlined_call_operand.vmem [shape: f32[64,32], index: 1, kind: input, shape index: {}]
  %s2 = inlined_call_operand.vmem [shape: f32[32,64], index: 2, kind: input, shape index: {}]
  %s3 = inlined_call_operand.vmem [shape: f32[16,32], index: 3, kind: input, shape index: {}]
  %s4 = inlined_call_operand.vmem [shape: f32[1,16], index: 4, kind: input, shape index: {}]
  %s5 = inlined_call_operand.vmem [shape: f32[113,1], index: 5, kind: input, shape index: {}]
  %s6 = inlined_call_operand.hbm [shape: f32[1,16], index: 6, kind: output, shape index: {}]
  %s7 = sld [smem:[#allocation0]]
  $region34: #{tpu_custom_call.1} parent=0
    _
  %s9 = ssub.s32 1, %s7
  %s10 = scalar_select 0, %s9, %s7
  $region1: #{tpu_custom_call.1} parent=0
    #allocation2 [shape = 'u8[512]{0}', space=vmem, size = 0x400, scoped, tag = 'output window, operand 0, single buffered']
    #allocation3 [shape = 's32[1]{0}', space=sflag, size = 0x4, scoped, tag = 'scoped memory for tpu_custom_call.1']
    %11 = vsyncpa [#allocation3], 0
    // Predicated region
    $region2: #{tpu_custom_call.1} parent=1 // pred_check
      _
    $region3: #{tpu_custom_call.1} parent=1 // pred_check_branch
      %13 = sbr.rel (0) target = $region5
    $region4: #{tpu_custom_call.1} parent=1 // pred_region
      _
    $region5: #{tpu_custom_call.1} parent=1 // pred_fallthru
      _
    // Predicated region
    $region6: #{tpu_custom_call.1} parent=1 // pred_check
      _
    $region7: #{tpu_custom_call.1} parent=1 // pred_check_branch
      %15 = sbr.rel (0) target = $region9
    $region8: #{tpu_custom_call.1} parent=1 // pred_region
      _
    $region9: #{tpu_custom_call.1} parent=1 // pred_fallthru
      _
    // Predicated region
    $region10: #{tpu_custom_call.1} parent=1 // pred_check
      _
    $region11: #{tpu_custom_call.1} parent=1 // pred_check_branch
      %17 = sbr.rel (0) target = $region13
    $region12: #{tpu_custom_call.1} parent=1 // pred_region
      _
    $region13: #{tpu_custom_call.1} parent=1 // pred_fallthru
      _
    // Predicated region
    $region14: #{tpu_custom_call.1} parent=1 // pred_check
      _
    $region15: #{tpu_custom_call.1} parent=1 // pred_check_branch
      %19 = sbr.rel (0) target = $region17
    $region16: #{tpu_custom_call.1} parent=1 // pred_region
      _
    $region17: #{tpu_custom_call.1} parent=1 // pred_fallthru
      _
    // Predicated region
    $region18: #{tpu_custom_call.1} parent=1 // pred_check
      _
    $region19: #{tpu_custom_call.1} parent=1 // pred_check_branch
      %21 = sbr.rel (0) target = $region21
    $region20: #{tpu_custom_call.1} parent=1 // pred_region
      _
    $region21: #{tpu_custom_call.1} parent=1 // pred_fallthru
      _
    // Predicated region
    $region22: #{tpu_custom_call.1} parent=1 // pred_check
      _
    $region23: #{tpu_custom_call.1} parent=1 // pred_check_branch
      %23 = sbr.rel (0) target = $region25
    $region24: #{tpu_custom_call.1} parent=1 // pred_region
      _
    $region25: #{tpu_custom_call.1} parent=1 // pred_fallthru
      _
    %v24 = vld [vmem:[%s0] sm:$0xff]
    %v25 = vld [vmem:[%s0 + $0x8] sm:$0xff]
    %v26 = vld [vmem:[%s0 + $0x10] sm:$0xff]
    %v27 = vld [vmem:[%s0 + $0x18] sm:$0xff]
    %v28 = vld [vmem:[%s5] sm:$0xff]
    %v29 = vld [vmem:[%s5 + $0x8] sm:$0xff]
    %v30 = vld [vmem:[%s5 + $0x10] sm:$0xff]
    %v31 = vld [vmem:[%s5 + $0x18] sm:$0xff]
    %v32 = vld [vmem:[%s5 + $0x20] sm:$0xff]
    %v33 = vld [vmem:[%s5 + $0x28] sm:$0xff]
    %v34 = vld [vmem:[%s5 + $0x30] sm:$0xff]
    %v35 = vld [vmem:[%s5 + $0x38] sm:$0xff]
    %v36 = vld [vmem:[%s5 + $0x40] sm:$0xff]
    %v37 = vld [vmem:[%s5 + $0x48] sm:$0xff]
    %v38 = vld [vmem:[%s5 + $0x50] sm:$0xff]
    %v39 = vld [vmem:[%s5 + $0x58] sm:$0xff]
    %v40 = vld [vmem:[%s5 + $0x60] sm:$0xff]
    %v41 = vld [vmem:[%s5 + $0x68] sm:$0xff]
    %v42 = vld [vmem:[%s5 + $0x70] sm:$0x1]
    %v43 = vld [vmem:[%s1] sm:$0xff]
    %v44 = vld [vmem:[%s1 + $0x8] sm:$0xff]
    %v45 = vld [vmem:[%s1 + $0x10] sm:$0xff]
    %v46 = vld [vmem:[%s1 + $0x18] sm:$0xff]
    %v47 = vld [vmem:[%s1 + $0x20] sm:$0xff]
    %v48 = vld [vmem:[%s1 + $0x28] sm:$0xff]
    %v49 = vld [vmem:[%s1 + $0x30] sm:$0xff]
    %v50 = vld [vmem:[%s1 + $0x38] sm:$0xff]
    %52 = vset.pattern.permute.xlu0 0
    %53 = vperm.xlu0 %52, %v28
    %v54 = vpop.permute.xlu0 %53
    %57 = vset.pattern.permute.xlu0 0
    %58 = vperm.xlu0 %57, %v29
    %v59 = vpop.permute.xlu0 %58
    %62 = vset.pattern.permute.xlu0 0
    %63 = vperm.xlu0 %62, %v30
    %v64 = vpop.permute.xlu0 %63
    %67 = vset.pattern.permute.xlu0 0
    %68 = vperm.xlu0 %67, %v31
    %v69 = vpop.permute.xlu0 %68
    %72 = vset.pattern.permute.xlu0 0
    %73 = vperm.xlu0 %72, %v32
    %v74 = vpop.permute.xlu0 %73
    %77 = vset.pattern.permute.xlu0 0
    %78 = vperm.xlu0 %77, %v33
    %v79 = vpop.permute.xlu0 %78
    %82 = vset.pattern.permute.xlu0 0
    %83 = vperm.xlu0 %82, %v34
    %v84 = vpop.permute.xlu0 %83
    %87 = vset.pattern.permute.xlu0 0
    %88 = vperm.xlu0 %87, %v35
    %v89 = vpop.permute.xlu0 %88
    %vm91 = vcmask 261120
    %v93 = vsel %vm91, %v43, 0
    %v96 = vsel %vm91, %v44, 0
    %v99 = vsel %vm91, %v45, 0
    %v102 = vsel %vm91, %v46, 0
    %v105 = vsel %vm91, %v47, 0
    %v108 = vsel %vm91, %v48, 0
    %v111 = vsel %vm91, %v49, 0
    %v114 = vsel %vm91, %v50, 0
    %116 = vmatprep.subr.mxu0 0.0
    %117 = vmatpush1.msra.mxu0 %v24
    %118 = vmatprep.subr.mxu0 0.0
    %119 = vmatpush1.msra.mxu0 %v25
    %120 = vmatprep.subr.mxu0 0.0
    %121 = vmatpush1.msra.mxu0 %v26
    %122 = vmatprep.subr.mxu0 0.0
    %123 = vmatpush1.msra.mxu0 %v27
    %124 = vmatprep.subr.mxu0 0.0
    %125 = vmatpush1.msra.mxu0 0.0
    %126 = vmatprep.subr.mxu0 0.0
    %127 = vmatpush1.msra.mxu0 0.0
    %128 = vmatprep.subr.mxu0 0.0
    %129 = vmatpush1.msra.mxu0 0.0
    %130 = vmatprep.subr.mxu0 0.0
    %131 = vmatpush1.msra.mxu0 0.0
    %132 = vmatprep.subr.mxu0 0.0
    %133 = vmatpush1.msra.mxu0 0.0
    %134 = vmatprep.subr.mxu0 0.0
    %135 = vmatpush1.msra.mxu0 0.0
    %136 = vmatprep.subr.mxu0 0.0
    %137 = vmatpush1.msra.mxu0 0.0
    %138 = vmatprep.subr.mxu0 0.0
    %139 = vmatpush1.msra.mxu0 0.0
    %140 = vmatprep.subr.mxu0 0.0
    %141 = vmatpush1.msra.mxu0 0.0
    %142 = vmatprep.subr.mxu0 0.0
    %143 = vmatpush1.msra.mxu0 0.0
    %144 = vmatprep.subr.mxu0 0.0
    %145 = vmatpush1.msra.mxu0 0.0
    %146 = vmatprep.subr.mxu0 0.0
    %147 = vmatpush1.msra.mxu0 0.0
    %148 = vmatprep.subr.mxu0 0.0
    %149 = vmatpush1.msra.mxu0 0.0
    %150 = vmatprep.subr.mxu0 0.0
    %151 = vmatpush1.msra.mxu0 0.0
    %152 = vmatprep.subr.mxu0 0.0
    %153 = vmatpush1.msra.mxu0 0.0
    %154 = vmatprep.subr.mxu0 0.0
    %155 = vmatpush1.msra.mxu0 0.0
    %156 = vmatprep.subr.mxu0 0.0
    %157 = vmatpush1.msra.mxu0 0.0
    %158 = vmatprep.subr.mxu0 0.0
    %159 = vmatpush1.msra.mxu0 0.0
    %160 = vmatprep.subr.mxu0 0.0
    %161 = vmatpush1.msra.mxu0 0.0
    %162 = vmatprep.subr.mxu0 0.0
    %163 = vmatpush1.msra.mxu0 0.0
    %164 = vmatprep.subr.mxu0 0.0
    %165 = vmatpush1.msra.mxu0 0.0
    %166 = vmatprep.subr.mxu0 0.0
    %167 = vmatpush1.msra.mxu0 0.0
    %168 = vmatprep.subr.mxu0 0.0
    %169 = vmatpush1.msra.mxu0 0.0
    %170 = vmatprep.subr.mxu0 0.0
    %171 = vmatpush1.msra.mxu0 0.0
    %172 = vmatprep.subr.mxu0 0.0
    %173 = vmatpush1.msra.mxu0 0.0
    %174 = vmatprep.subr.mxu0 0.0
    %175 = vmatpush1.msra.mxu0 0.0
    %176 = vmatprep.subr.mxu0 0.0
    %177 = vmatpush1.msra.mxu0 0.0
    %178 = vmatprep.subr.mxu0 0.0
    %179 = vmatpush1.msra.mxu0 0.0
    %180 = vmatprep.mubr.f32.mxu0 0.0
    %181 = vmatmul.mubr.f32.gmra.mrb[0].mxu0 %v93
    %v182 = vpop.f32.mrb[0].mxu0
    %v183 = vadd.f32 %v54, %v182
    %v184 = vpop.f32.mrb[0].mxu0
    %185 = vmatprep.mubr.f32.mxu0 0.0
    %186 = vmatmul.mubr.f32.gmra.mrb[0].mxu0 %v96
    %v187 = vpop.f32.mrb[0].mxu0
    %v188 = vadd.f32 %v59, %v187
    %v189 = vpop.f32.mrb[0].mxu0
    %190 = vmatprep.mubr.f32.mxu0 0.0
    %191 = vmatmul.mubr.f32.gmra.mrb[0].mxu0 %v99
    %v192 = vpop.f32.mrb[0].mxu0
    %v193 = vadd.f32 %v64, %v192
    %v194 = vpop.f32.mrb[0].mxu0
    %195 = vmatprep.mubr.f32.mxu0 0.0
    %196 = vmatmul.mubr.f32.gmra.mrb[0].mxu0 %v102
    %v197 = vpop.f32.mrb[0].mxu0
    %v198 = vadd.f32 %v69, %v197
    %v199 = vpop.f32.mrb[0].mxu0
    %200 = vmatprep.mubr.f32.mxu0 0.0
    %201 = vmatmul.mubr.f32.gmra.mrb[0].mxu0 %v105
    %v202 = vpop.f32.mrb[0].mxu0
    %v203 = vadd.f32 %v74, %v202
    %v204 = vpop.f32.mrb[0].mxu0
    %205 = vmatprep.mubr.f32.mxu0 0.0
    %206 = vmatmul.mubr.f32.gmra.mrb[0].mxu0 %v108
    %v207 = vpop.f32.mrb[0].mxu0
    %v208 = vadd.f32 %v79, %v207
    %v209 = vpop.f32.mrb[0].mxu0
    %210 = vmatprep.mubr.f32.mxu0 0.0
    %211 = vmatmul.mubr.f32.gmra.mrb[0].mxu0 %v111
    %v212 = vpop.f32.mrb[0].mxu0
    %v213 = vadd.f32 %v84, %v212
    %v214 = vpop.f32.mrb[0].mxu0
    %215 = vmatprep.mubr.f32.mxu0 0.0
    %216 = vmatmul.mubr.f32.gmra.mrb[0].mxu0 %v114
    %v217 = vpop.f32.mrb[0].mxu0
    %v218 = vadd.f32 %v89, %v217
    %v219 = vpop.f32.mrb[0].mxu0
    %220 = vdwg.mxu0
    %v221 = vmax.f32 %v183, 0.0
    %v222 = vmax.f32 %v188, 0.0
    %v223 = vmax.f32 %v193, 0.0
    %v224 = vmax.f32 %v198, 0.0
    %v225 = vmax.f32 %v203, 0.0
    %v226 = vmax.f32 %v208, 0.0
    %v227 = vmax.f32 %v213, 0.0
    %v228 = vmax.f32 %v218, 0.0
    %v229 = vld [vmem:[%s2] sm:$0xff]
    %v230 = vld [vmem:[%s2 + $0x8] sm:$0xff]
    %v231 = vld [vmem:[%s2 + $0x10] sm:$0xff]
    %v232 = vld [vmem:[%s2 + $0x18] sm:$0xff]
    %234 = vset.pattern.permute.xlu0 0
    %235 = vperm.xlu0 %234, %v36
    %v236 = vpop.permute.xlu0 %235
    %239 = vset.pattern.permute.xlu0 0
    %240 = vperm.xlu0 %239, %v37
    %v241 = vpop.permute.xlu0 %240
    %244 = vset.pattern.permute.xlu0 0
    %245 = vperm.xlu0 %244, %v38
    %v246 = vpop.permute.xlu0 %245
    %249 = vset.pattern.permute.xlu0 0
    %250 = vperm.xlu0 %249, %v39
    %v251 = vpop.permute.xlu0 %250
    %vm253 = vcmask 523264
    %v255 = vsel %vm253, %v229, 0
    %v258 = vsel %vm253, %v230, 0
    %v261 = vsel %vm253, %v231, 0
    %v264 = vsel %vm253, %v232, 0
    %266 = vmatprep.subr.mxu0 0.0
    %267 = vmatpush1.msra.mxu0 %v221
    %268 = vmatprep.subr.mxu0 0.0
    %269 = vmatpush1.msra.mxu0 %v222
    %270 = vmatprep.subr.mxu0 0.0
    %271 = vmatpush1.msra.mxu0 %v223
    %272 = vmatprep.subr.mxu0 0.0
    %273 = vmatpush1.msra.mxu0 %v224
    %274 = vmatprep.subr.mxu0 0.0
    %275 = vmatpush1.msra.mxu0 %v225
    %276 = vmatprep.subr.mxu0 0.0
    %277 = vmatpush1.msra.mxu0 %v226
    %278 = vmatprep.subr.mxu0 0.0
    %279 = vmatpush1.msra.mxu0 %v227
    %280 = vmatprep.subr.mxu0 0.0
    %281 = vmatpush1.msra.mxu0 %v228
    %282 = vmatprep.subr.mxu0 0.0
    %283 = vmatpush1.msra.mxu0 0.0
    %284 = vmatprep.subr.mxu0 0.0
    %285 = vmatpush1.msra.mxu0 0.0
    %286 = vmatprep.subr.mxu0 0.0
    %287 = vmatpush1.msra.mxu0 0.0
    %288 = vmatprep.subr.mxu0 0.0
    %289 = vmatpush1.msra.mxu0 0.0
    %290 = vmatprep.subr.mxu0 0.0
    %291 = vmatpush1.msra.mxu0 0.0
    %292 = vmatprep.subr.mxu0 0.0
    %293 = vmatpush1.msra.mxu0 0.0
    %294 = vmatprep.subr.mxu0 0.0
    %295 = vmatpush1.msra.mxu0 0.0
    %296 = vmatprep.subr.mxu0 0.0
    %297 = vmatpush1.msra.mxu0 0.0
    %298 = vmatprep.subr.mxu0 0.0
    %299 = vmatpush1.msra.mxu0 0.0
    %300 = vmatprep.subr.mxu0 0.0
    %301 = vmatpush1.msra.mxu0 0.0
    %302 = vmatprep.subr.mxu0 0.0
    %303 = vmatpush1.msra.mxu0 0.0
    %304 = vmatprep.subr.mxu0 0.0
    %305 = vmatpush1.msra.mxu0 0.0
    %306 = vmatprep.subr.mxu0 0.0
    %307 = vmatpush1.msra.mxu0 0.0
    %308 = vmatprep.subr.mxu0 0.0
    %309 = vmatpush1.msra.mxu0 0.0
    %310 = vmatprep.subr.mxu0 0.0
    %311 = vmatpush1.msra.mxu0 0.0
    %312 = vmatprep.subr.mxu0 0.0
    %313 = vmatpush1.msra.mxu0 0.0
    %314 = vmatprep.subr.mxu0 0.0
    %315 = vmatpush1.msra.mxu0 0.0
    %316 = vmatprep.subr.mxu0 0.0
    %317 = vmatpush1.msra.mxu0 0.0
    %318 = vmatprep.subr.mxu0 0.0
    %319 = vmatpush1.msra.mxu0 0.0
    %320 = vmatprep.subr.mxu0 0.0
    %321 = vmatpush1.msra.mxu0 0.0
    %322 = vmatprep.subr.mxu0 0.0
    %323 = vmatpush1.msra.mxu0 0.0
    %324 = vmatprep.subr.mxu0 0.0
    %325 = vmatpush1.msra.mxu0 0.0
    %326 = vmatprep.subr.mxu0 0.0
    %327 = vmatpush1.msra.mxu0 0.0
    %328 = vmatprep.subr.mxu0 0.0
    %329 = vmatpush1.msra.mxu0 0.0
    %330 = vmatprep.mubr.f32.mxu0 0.0
    %331 = vmatmul.mubr.f32.gmra.mrb[0].mxu0 %v255
    %v332 = vpop.f32.mrb[0].mxu0
    %v333 = vadd.f32 %v236, %v332
    %v334 = vpop.f32.mrb[0].mxu0
    %335 = vmatprep.mubr.f32.mxu0 0.0
    %336 = vmatmul.mubr.f32.gmra.mrb[0].mxu0 %v258
    %v337 = vpop.f32.mrb[0].mxu0
    %v338 = vadd.f32 %v241, %v337
    %v339 = vpop.f32.mrb[0].mxu0
    %340 = vmatprep.mubr.f32.mxu0 0.0
    %341 = vmatmul.mubr.f32.gmra.mrb[0].mxu0 %v261
    %v342 = vpop.f32.mrb[0].mxu0
    %v343 = vadd.f32 %v246, %v342
    %v344 = vpop.f32.mrb[0].mxu0
    %345 = vmatprep.mubr.f32.mxu0 0.0
    %346 = vmatmul.mubr.f32.gmra.mrb[0].mxu0 %v264
    %v347 = vpop.f32.mrb[0].mxu0
    %v348 = vadd.f32 %v251, %v347
    %v349 = vpop.f32.mrb[0].mxu0
    %350 = vdwg.mxu0
    %v351 = vmax.f32 %v333, 0.0
    %v352 = vmax.f32 %v338, 0.0
    %v353 = vmax.f32 %v343, 0.0
    %v354 = vmax.f32 %v348, 0.0
    %v355 = vld [vmem:[%s3] sm:$0xff]
    %v356 = vld [vmem:[%s3 + $0x8] sm:$0xff]
    %358 = vset.pattern.permute.xlu0 0
    %359 = vperm.xlu0 %358, %v40
    %v360 = vpop.permute.xlu0 %359
    %363 = vset.pattern.permute.xlu0 0
    %364 = vperm.xlu0 %363, %v41
    %v365 = vpop.permute.xlu0 %364
    %v368 = vsel %vm91, %v355, 0
    %v371 = vsel %vm91, %v356, 0
    %373 = vmatprep.subr.mxu0 0.0
    %374 = vmatpush1.msra.mxu0 %v351
    %375 = vmatprep.subr.mxu0 0.0
    %376 = vmatpush1.msra.mxu0 %v352
    %377 = vmatprep.subr.mxu0 0.0
    %378 = vmatpush1.msra.mxu0 %v353
    %379 = vmatprep.subr.mxu0 0.0
    %380 = vmatpush1.msra.mxu0 %v354
    %381 = vmatprep.subr.mxu0 0.0
    %382 = vmatpush1.msra.mxu0 0.0
    %383 = vmatprep.subr.mxu0 0.0
    %384 = vmatpush1.msra.mxu0 0.0
    %385 = vmatprep.subr.mxu0 0.0
    %386 = vmatpush1.msra.mxu0 0.0
    %387 = vmatprep.subr.mxu0 0.0
    %388 = vmatpush1.msra.mxu0 0.0
    %389 = vmatprep.subr.mxu0 0.0
    %390 = vmatpush1.msra.mxu0 0.0
    %391 = vmatprep.subr.mxu0 0.0
    %392 = vmatpush1.msra.mxu0 0.0
    %393 = vmatprep.subr.mxu0 0.0
    %394 = vmatpush1.msra.mxu0 0.0
    %395 = vmatprep.subr.mxu0 0.0
    %396 = vmatpush1.msra.mxu0 0.0
    %397 = vmatprep.subr.mxu0 0.0
    %398 = vmatpush1.msra.mxu0 0.0
    %399 = vmatprep.subr.mxu0 0.0
    %400 = vmatpush1.msra.mxu0 0.0
    %401 = vmatprep.subr.mxu0 0.0
    %402 = vmatpush1.msra.mxu0 0.0
    %403 = vmatprep.subr.mxu0 0.0
    %404 = vmatpush1.msra.mxu0 0.0
    %405 = vmatprep.subr.mxu0 0.0
    %406 = vmatpush1.msra.mxu0 0.0
    %407 = vmatprep.subr.mxu0 0.0
    %408 = vmatpush1.msra.mxu0 0.0
    %409 = vmatprep.subr.mxu0 0.0
    %410 = vmatpush1.msra.mxu0 0.0
    %411 = vmatprep.subr.mxu0 0.0
    %412 = vmatpush1.msra.mxu0 0.0
    %413 = vmatprep.subr.mxu0 0.0
    %414 = vmatpush1.msra.mxu0 0.0
    %415 = vmatprep.subr.mxu0 0.0
    %416 = vmatpush1.msra.mxu0 0.0
    %417 = vmatprep.subr.mxu0 0.0
    %418 = vmatpush1.msra.mxu0 0.0
    %419 = vmatprep.subr.mxu0 0.0
    %420 = vmatpush1.msra.mxu0 0.0
    %421 = vmatprep.subr.mxu0 0.0
    %422 = vmatpush1.msra.mxu0 0.0
    %423 = vmatprep.subr.mxu0 0.0
    %424 = vmatpush1.msra.mxu0 0.0
    %425 = vmatprep.subr.mxu0 0.0
    %426 = vmatpush1.msra.mxu0 0.0
    %427 = vmatprep.subr.mxu0 0.0
    %428 = vmatpush1.msra.mxu0 0.0
    %429 = vmatprep.subr.mxu0 0.0
    %430 = vmatpush1.msra.mxu0 0.0
    %431 = vmatprep.subr.mxu0 0.0
    %432 = vmatpush1.msra.mxu0 0.0
    %433 = vmatprep.subr.mxu0 0.0
    %434 = vmatpush1.msra.mxu0 0.0
    %435 = vmatprep.subr.mxu0 0.0
    %436 = vmatpush1.msra.mxu0 0.0
    %437 = vmatprep.mubr.f32.mxu0 0.0
    %438 = vmatmul.mubr.f32.gmra.mrb[0].mxu0 %v368
    %v439 = vpop.f32.mrb[0].mxu0
    %v440 = vadd.f32 %v360, %v439
    %v441 = vpop.f32.mrb[0].mxu0
    %442 = vmatprep.mubr.f32.mxu0 0.0
    %443 = vmatmul.mubr.f32.gmra.mrb[0].mxu0 %v371
    %v444 = vpop.f32.mrb[0].mxu0
    %v445 = vadd.f32 %v365, %v444
    %v446 = vpop.f32.mrb[0].mxu0
    %447 = vdwg.mxu0
    %v448 = vmax.f32 %v440, 0.0
    %v449 = vmax.f32 %v445, 0.0
    %v450 = vld [vmem:[%s4] sm:$0x1]
    %452 = vset.pattern.permute.xlu0 0
    %453 = vperm.xlu0 %452, %v42
    %v454 = vpop.permute.xlu0 %453
    %vm456 = vcmask 130048
    %v458 = vsel %vm456, %v450, 0
    %460 = vmatprep.subr.mxu0 0.0
    %461 = vmatpush1.msra.mxu0 %v448
    %462 = vmatprep.subr.mxu0 0.0
    %463 = vmatpush1.msra.mxu0 %v449
    %464 = vmatprep.subr.mxu0 0.0
    %465 = vmatpush1.msra.mxu0 0.0
    %466 = vmatprep.subr.mxu0 0.0
    %467 = vmatpush1.msra.mxu0 0.0
    %468 = vmatprep.subr.mxu0 0.0
    %469 = vmatpush1.msra.mxu0 0.0
    %470 = vmatprep.subr.mxu0 0.0
    %471 = vmatpush1.msra.mxu0 0.0
    %472 = vmatprep.subr.mxu0 0.0
    %473 = vmatpush1.msra.mxu0 0.0
    %474 = vmatprep.subr.mxu0 0.0
    %475 = vmatpush1.msra.mxu0 0.0
    %476 = vmatprep.subr.mxu0 0.0
    %477 = vmatpush1.msra.mxu0 0.0
    %478 = vmatprep.subr.mxu0 0.0
    %479 = vmatpush1.msra.mxu0 0.0
    %480 = vmatprep.subr.mxu0 0.0
    %481 = vmatpush1.msra.mxu0 0.0
    %482 = vmatprep.subr.mxu0 0.0
    %483 = vmatpush1.msra.mxu0 0.0
    %484 = vmatprep.subr.mxu0 0.0
    %485 = vmatpush1.msra.mxu0 0.0
    %486 = vmatprep.subr.mxu0 0.0
    %487 = vmatpush1.msra.mxu0 0.0
    %488 = vmatprep.subr.mxu0 0.0
    %489 = vmatpush1.msra.mxu0 0.0
    %490 = vmatprep.subr.mxu0 0.0
    %491 = vmatpush1.msra.mxu0 0.0
    %492 = vmatprep.subr.mxu0 0.0
    %493 = vmatpush1.msra.mxu0 0.0
    %494 = vmatprep.subr.mxu0 0.0
    %495 = vmatpush1.msra.mxu0 0.0
    %496 = vmatprep.subr.mxu0 0.0
    %497 = vmatpush1.msra.mxu0 0.0
    %498 = vmatprep.subr.mxu0 0.0
    %499 = vmatpush1.msra.mxu0 0.0
    %500 = vmatprep.subr.mxu0 0.0
    %501 = vmatpush1.msra.mxu0 0.0
    %502 = vmatprep.subr.mxu0 0.0
    %503 = vmatpush1.msra.mxu0 0.0
    %504 = vmatprep.subr.mxu0 0.0
    %505 = vmatpush1.msra.mxu0 0.0
    %506 = vmatprep.subr.mxu0 0.0
    %507 = vmatpush1.msra.mxu0 0.0
    %508 = vmatprep.subr.mxu0 0.0
    %509 = vmatpush1.msra.mxu0 0.0
    %510 = vmatprep.subr.mxu0 0.0
    %511 = vmatpush1.msra.mxu0 0.0
    %512 = vmatprep.subr.mxu0 0.0
    %513 = vmatpush1.msra.mxu0 0.0
    %514 = vmatprep.subr.mxu0 0.0
    %515 = vmatpush1.msra.mxu0 0.0
    %516 = vmatprep.subr.mxu0 0.0
    %517 = vmatpush1.msra.mxu0 0.0
    %518 = vmatprep.subr.mxu0 0.0
    %519 = vmatpush1.msra.mxu0 0.0
    %520 = vmatprep.subr.mxu0 0.0
    %521 = vmatpush1.msra.mxu0 0.0
    %522 = vmatprep.subr.mxu0 0.0
    %523 = vmatpush1.msra.mxu0 0.0
    %524 = vmatprep.mubr.f32.mxu0 0.0
    %525 = vmatmul.mubr.f32.gmra.mrb[0].mxu0 %v458
    %v526 = vpop.f32.mrb[0].mxu0
    %v527 = vadd.f32 %v454, %v526
    %v528 = vpop.f32.mrb[0].mxu0
    %529 = vdwg.mxu0
    %v530 = vxor.u32 %v527, 2147483648
    %v531 = vmul.f32 %v530, 1.442695
    %v532 = vpow.pop %v531
    %v533 = vadd.f32 %v532, 1.0
    %v534 = vrcp.pop %v533
    %v535 = vmul.f32 1.0, %v534
    %vm536 = vcmask 122880
    %537 = vst.msk [vmem:[#allocation2] sm:$0x1] %vm536, %v535
    // Predicated region
    $region26: #{tpu_custom_call.1} parent=1 // pred_check
      _
    $region27: #{tpu_custom_call.1} parent=1 // pred_check_branch
      %539 = sbr.rel (0) target = $region29
    $region28: #{tpu_custom_call.1} parent=1 // pred_region
      %s541 = ssub.s32 16, 16
      %542 = vsyncadd [#allocation3], %s541
      %s544 = sshll.u32 [#allocation2], 4
      %s545 = int_to_ptr.vmem [resolvable:$true] %s544
      %547 = dma.vmem_to_hbm [thread:$0]  %s545, 16, %s6, [#allocation3]
    $region29: #{tpu_custom_call.1} parent=1 // pred_fallthru
      _
    // Predicated region
    $region30: #{tpu_custom_call.1} parent=1 // pred_check
      _
    $region31: #{tpu_custom_call.1} parent=1 // pred_check_branch
      %549 = sbr.rel (0) target = $region33
    $region32: #{tpu_custom_call.1} parent=1 // pred_region
      %550 = dma.done [#allocation3], 16
    $region33: #{tpu_custom_call.1} parent=1 // pred_fallthru
      _
    %551 = vsyncpa [#allocation3], 1

</llo_original>
